<compile_context>
chip_gen: v6e
topology: v6e:2x2x1
jax: 0.10.0
libtpu: 0.0.40
codegen_flags: <defaults>
</compile_context>

<pallas_src>
import functools

import jax
import jax.numpy as jnp
from jax.experimental import pallas as pl
from jax.experimental.pallas import tpu as pltpu

_RING = 8  # power of two; max number of batches with copies concurrently in flight


def _soft_prompt_concat_kernel(
    prompt_hbm,  # [num_tokens, D]       raw HBM ref
    x_hbm,       # [B, S, D]             raw HBM ref
    out_hbm,     # [B, num_tokens+S, D]  raw HBM ref
    x_sems,      # DMA semaphores, shape (_RING,)
    p_sems,      # DMA semaphores, shape (_RING,)
    *,
    num_tokens: int,
    seq_len: int,
    batch: int,
):
    def wait_slot(slot):
        # Wait descriptors only need shape-matching windows; the exact
        # (dynamic) batch index used at start() time is irrelevant.
        pltpu.make_async_copy(
            x_hbm.at[0],
            out_hbm.at[0, pl.ds(num_tokens, seq_len), :],
            x_sems.at[slot],
        ).wait()
        pltpu.make_async_copy(
            prompt_hbm,
            out_hbm.at[0, pl.ds(0, num_tokens), :],
            p_sems.at[slot],
        ).wait()

    # Issue loop: one full-sequence bulk DMA + one tiny prompt DMA per batch.
    # Up to _RING batches (2*_RING DMAs) stay in flight; a slot is reclaimed
    # (waited) only when it is about to be reused, so for small B the issue
    # loop never blocks and everything overlaps.
    @pl.loop(0, batch)
    def _(b):
        slot = b & (_RING - 1)

        @pl.when(b >= _RING)
        def _():
            wait_slot(slot)

        # Bulk copy: X[b, :, :] -> Y[b, num_tokens:num_tokens+S, :].
        # Both windows are contiguous (full trailing dims), one linear DMA.
        pltpu.make_async_copy(
            x_hbm.at[b],
            out_hbm.at[b, pl.ds(num_tokens, seq_len), :],
            x_sems.at[slot],
        ).start()
        # Prompt rows: P -> Y[b, 0:num_tokens, :] (tiny, hidden under bulk).
        pltpu.make_async_copy(
            prompt_hbm,
            out_hbm.at[b, pl.ds(0, num_tokens), :],
            p_sems.at[slot],
        ).start()

    # Drain all still-outstanding copies once at the end.
    @pl.loop(0, min(_RING, batch))
    def _(slot):
        wait_slot(slot)


def divergence_soft_prompt_forward(prompt: jax.Array, x: jax.Array) -> jax.Array:
    """Prepend soft-prompt embeddings to input embeddings.

    prompt: [num_tokens, D]
    x:      [B, S, D]
    returns [B, num_tokens + S, D]
    """
    num_tokens, d = prompt.shape
    b, s, d2 = x.shape
    assert d == d2, "embedding_dim mismatch"
    assert s >= 1 and num_tokens >= 1 and b >= 1
    out_seq = num_tokens + s

    # DMA cannot cast; cast the (tiny) prompt to the activation dtype up front.
    prompt = prompt.astype(x.dtype)

    itemsize = jnp.dtype(x.dtype).itemsize
    bytes_accessed = (b * s * d + num_tokens * d + b * out_seq * d) * itemsize

    kernel = functools.partial(
        _soft_prompt_concat_kernel,
        num_tokens=num_tokens,
        seq_len=s,
        batch=b,
    )

    return pl.pallas_call(
        kernel,
        out_shape=jax.ShapeDtypeStruct((b, out_seq, d), x.dtype),
        grid_spec=pltpu.PrefetchScalarGridSpec(
            num_scalar_prefetch=0,
            grid=(1,),  # single step; all batches handled via in-kernel DMA ring
            in_specs=[
                pl.BlockSpec(memory_space=pl.ANY),  # prompt stays in HBM
                pl.BlockSpec(memory_space=pl.ANY),  # x stays in HBM
            ],
            out_specs=pl.BlockSpec(memory_space=pl.ANY),  # out written via DMA
            scratch_shapes=[
                pltpu.SemaphoreType.DMA((_RING,)),  # bulk X copies
                pltpu.SemaphoreType.DMA((_RING,)),  # prompt copies
            ],
        ),
        compiler_params=pltpu.CompilerParams(
            dimension_semantics=("arbitrary",),
        ),
        cost_estimate=pl.CostEstimate(
            flops=0, transcendentals=0, bytes_accessed=bytes_accessed
        ),
    )(prompt, x)


if __name__ == "__main__":
    # Small shapes consistent with the module's forward pass.
    # embedding_dim chosen as a multiple of 128 (lane-dense) per perf guidance.
    num_tokens = 4
    embedding_dim = 128
    init_std = 0.02
    batch_size = 2
    seq_len = 8

    key = jax.random.PRNGKey(0)
    k_prompt, k_x = jax.random.split(key)

    # Deterministic parameter init (mirrors torch.randn(T, D) * init_std).
    prompt_embeddings = (
        jax.random.normal(k_prompt, (num_tokens, embedding_dim), dtype=jnp.float32)
        * init_std
    )
    input_embeddings = jax.random.normal(
        k_x, (batch_size, seq_len, embedding_dim), dtype=jnp.float32
    )

    out = divergence_soft_prompt_forward(prompt_embeddings, input_embeddings)
    out = jax.block_until_ready(out)

    # Reference check (pure JAX concat).
    ref = jnp.concatenate(
        [
            jnp.broadcast_to(
                prompt_embeddings[None], (batch_size, num_tokens, embedding_dim)
            ),
            input_embeddings,
        ],
        axis=1,
    )
    assert out.shape == (batch_size, num_tokens + seq_len, embedding_dim)
    assert jnp.allclose(out, ref), "kernel output mismatch vs reference"

    # TODO(synk): the PyTorch forward's debug prints / requires_grad logging
    # have no computational effect and are not reproduced here.
    print("KERNEL_OK")
</pallas_src>

<mosaic_0001>
module attributes {stable_mosaic.version = 11 : i64} {
  func.func @_soft_prompt_concat_kernel(%arg0: i32, %arg1: memref<4x128xf32, #tpu.memory_space<any>>, %arg2: memref<2x8x128xf32, #tpu.memory_space<any>>, %arg3: memref<2x12x128xf32, #tpu.memory_space<any>>, %arg4: memref<8x!tpu.dma_semaphore, #tpu.memory_space<semaphore_mem>>, %arg5: memref<8x!tpu.dma_semaphore, #tpu.memory_space<semaphore_mem>>) attributes {dimension_semantics = [#tpu.dimension_semantics<arbitrary>], iteration_bounds = array<i64: 1>, scalar_prefetch = 0 : i64, scratch_operands = 2 : i64, tpu.core_type = #tpu.core_type<tc>, window_params = [{}, {}, {}]} {
    %c0_i32 = arith.constant 0 : i32
    %c2_i32 = arith.constant 2 : i32
    %0 = arith.addi %c0_i32, %c2_i32 : i32
    %c1_i32 = arith.constant 1 : i32
    scf.for %arg6 = %c0_i32 to %0 step %c1_i32  : i32 {
      %c1_i32_5 = arith.constant 1 : i32
      %2 = arith.muli %arg6, %c1_i32_5 : i32
      %c0_i32_6 = arith.constant 0 : i32
      %3 = arith.addi %c0_i32_6, %2 : i32
      %c7_i32 = arith.constant 7 : i32
      %4 = arith.andi %3, %c7_i32 : i32
      %c8_i32 = arith.constant 8 : i32
      %5 = arith.cmpi sge, %3, %c8_i32 : i32
      %6 = arith.extui %5 : i1 to i32
      %c0_i32_7 = arith.constant 0 : i32
      %7 = arith.cmpi ne, %6, %c0_i32_7 : i32
      scf.if %7 {
        %c0_i32_13 = arith.constant 0 : i32
        %c0_i32_14 = arith.constant 0 : i32
        %c0_i32_15 = arith.constant 0 : i32
        %c0_i32_16 = arith.constant 0 : i32
        %18 = tpu.memref_slice %arg2[%c0_i32_13, %c0_i32_15, %c0_i32_16] : memref<2x8x128xf32, #tpu.memory_space<any>> -> memref<1x8x128xf32, #tpu.memory_space<any>>
        %19 = tpu.memref_squeeze %18 : memref<1x8x128xf32, #tpu.memory_space<any>> -> memref<8x128xf32, #tpu.memory_space<any>>
        %c4_i32_17 = arith.constant 4 : i32
        %c0_i32_18 = arith.constant 0 : i32
        %20 = tpu.memref_slice %arg3[%c0_i32_14, %c4_i32_17, %c0_i32_18] : memref<2x12x128xf32, #tpu.memory_space<any>> -> memref<1x8x128xf32, #tpu.memory_space<any>>
        %21 = tpu.memref_squeeze %20 : memref<1x8x128xf32, #tpu.memory_space<any>> -> memref<8x128xf32, #tpu.memory_space<any>>
        %22 = tpu.memref_slice %arg4[%4] : memref<8x!tpu.dma_semaphore, #tpu.memory_space<semaphore_mem>> -> memref<1x!tpu.dma_semaphore, #tpu.memory_space<semaphore_mem>>
        %23 = tpu.memref_squeeze %22 : memref<1x!tpu.dma_semaphore, #tpu.memory_space<semaphore_mem>> -> memref<!tpu.dma_semaphore, #tpu.memory_space<semaphore_mem>>
        tpu.wait_dma2 semaphore(%23 : memref<!tpu.dma_semaphore, #tpu.memory_space<semaphore_mem>>) src(%19 : memref<8x128xf32, #tpu.memory_space<any>>) dst(%21 : memref<8x128xf32, #tpu.memory_space<any>>)
        %c0_i32_19 = arith.constant 0 : i32
        %c0_i32_20 = arith.constant 0 : i32
        %c0_i32_21 = arith.constant 0 : i32
        %24 = tpu.memref_slice %arg3[%c0_i32_19, %c0_i32_20, %c0_i32_21] : memref<2x12x128xf32, #tpu.memory_space<any>> -> memref<1x4x128xf32, #tpu.memory_space<any>>
        %25 = tpu.memref_squeeze %24 : memref<1x4x128xf32, #tpu.memory_space<any>> -> memref<4x128xf32, #tpu.memory_space<any>>
        %26 = tpu.memref_slice %arg5[%4] : memref<8x!tpu.dma_semaphore, #tpu.memory_space<semaphore_mem>> -> memref<1x!tpu.dma_semaphore, #tpu.memory_space<semaphore_mem>>
        %27 = tpu.memref_squeeze %26 : memref<1x!tpu.dma_semaphore, #tpu.memory_space<semaphore_mem>> -> memref<!tpu.dma_semaphore, #tpu.memory_space<semaphore_mem>>
        tpu.wait_dma2 semaphore(%27 : memref<!tpu.dma_semaphore, #tpu.memory_space<semaphore_mem>>) src(%arg1 : memref<4x128xf32, #tpu.memory_space<any>>) dst(%25 : memref<4x128xf32, #tpu.memory_space<any>>)
      } else {
      }
      %c0_i32_8 = arith.constant 0 : i32
      %c0_i32_9 = arith.constant 0 : i32
      %8 = tpu.memref_slice %arg2[%3, %c0_i32_8, %c0_i32_9] : memref<2x8x128xf32, #tpu.memory_space<any>> -> memref<1x8x128xf32, #tpu.memory_space<any>>
      %9 = tpu.memref_squeeze %8 : memref<1x8x128xf32, #tpu.memory_space<any>> -> memref<8x128xf32, #tpu.memory_space<any>>
      %c4_i32 = arith.constant 4 : i32
      %c0_i32_10 = arith.constant 0 : i32
      %10 = tpu.memref_slice %arg3[%3, %c4_i32, %c0_i32_10] : memref<2x12x128xf32, #tpu.memory_space<any>> -> memref<1x8x128xf32, #tpu.memory_space<any>>
      %11 = tpu.memref_squeeze %10 : memref<1x8x128xf32, #tpu.memory_space<any>> -> memref<8x128xf32, #tpu.memory_space<any>>
      %12 = tpu.memref_slice %arg4[%4] : memref<8x!tpu.dma_semaphore, #tpu.memory_space<semaphore_mem>> -> memref<1x!tpu.dma_semaphore, #tpu.memory_space<semaphore_mem>>
      %13 = tpu.memref_squeeze %12 : memref<1x!tpu.dma_semaphore, #tpu.memory_space<semaphore_mem>> -> memref<!tpu.dma_semaphore, #tpu.memory_space<semaphore_mem>>
      tpu.enqueue_dma source(%9 : memref<8x128xf32, #tpu.memory_space<any>>) target(%11 : memref<8x128xf32, #tpu.memory_space<any>>) target_semaphore(%13 : memref<!tpu.dma_semaphore, #tpu.memory_space<semaphore_mem>>)
      %c0_i32_11 = arith.constant 0 : i32
      %c0_i32_12 = arith.constant 0 : i32
      %14 = tpu.memref_slice %arg3[%3, %c0_i32_11, %c0_i32_12] : memref<2x12x128xf32, #tpu.memory_space<any>> -> memref<1x4x128xf32, #tpu.memory_space<any>>
      %15 = tpu.memref_squeeze %14 : memref<1x4x128xf32, #tpu.memory_space<any>> -> memref<4x128xf32, #tpu.memory_space<any>>
      %16 = tpu.memref_slice %arg5[%4] : memref<8x!tpu.dma_semaphore, #tpu.memory_space<semaphore_mem>> -> memref<1x!tpu.dma_semaphore, #tpu.memory_space<semaphore_mem>>
      %17 = tpu.memref_squeeze %16 : memref<1x!tpu.dma_semaphore, #tpu.memory_space<semaphore_mem>> -> memref<!tpu.dma_semaphore, #tpu.memory_space<semaphore_mem>>
      tpu.enqueue_dma source(%arg1 : memref<4x128xf32, #tpu.memory_space<any>>) target(%15 : memref<4x128xf32, #tpu.memory_space<any>>) target_semaphore(%17 : memref<!tpu.dma_semaphore, #tpu.memory_space<semaphore_mem>>)
    }
    %c2_i32_0 = arith.constant 2 : i32
    %c0_i32_1 = arith.constant 0 : i32
    %c2_i32_2 = arith.constant 2 : i32
    %1 = arith.addi %c0_i32_1, %c2_i32_2 : i32
    %c1_i32_3 = arith.constant 1 : i32
    scf.for %arg6 = %c0_i32_1 to %1 step %c1_i32_3  : i32 {
      %c1_i32_5 = arith.constant 1 : i32
      %2 = arith.muli %arg6, %c1_i32_5 : i32
      %c0_i32_6 = arith.constant 0 : i32
      %3 = arith.addi %c0_i32_6, %2 : i32
      %c0_i32_7 = arith.constant 0 : i32
      %c0_i32_8 = arith.constant 0 : i32
      %c0_i32_9 = arith.constant 0 : i32
      %c0_i32_10 = arith.constant 0 : i32
      %4 = tpu.memref_slice %arg2[%c0_i32_7, %c0_i32_9, %c0_i32_10] : memref<2x8x128xf32, #tpu.memory_space<any>> -> memref<1x8x128xf32, #tpu.memory_space<any>>
      %5 = tpu.memref_squeeze %4 : memref<1x8x128xf32, #tpu.memory_space<any>> -> memref<8x128xf32, #tpu.memory_space<any>>
      %c4_i32 = arith.constant 4 : i32
      %c0_i32_11 = arith.constant 0 : i32
      %6 = tpu.memref_slice %arg3[%c0_i32_8, %c4_i32, %c0_i32_11] : memref<2x12x128xf32, #tpu.memory_space<any>> -> memref<1x8x128xf32, #tpu.memory_space<any>>
      %7 = tpu.memref_squeeze %6 : memref<1x8x128xf32, #tpu.memory_space<any>> -> memref<8x128xf32, #tpu.memory_space<any>>
      %8 = tpu.memref_slice %arg4[%3] : memref<8x!tpu.dma_semaphore, #tpu.memory_space<semaphore_mem>> -> memref<1x!tpu.dma_semaphore, #tpu.memory_space<semaphore_mem>>
      %9 = tpu.memref_squeeze %8 : memref<1x!tpu.dma_semaphore, #tpu.memory_space<semaphore_mem>> -> memref<!tpu.dma_semaphore, #tpu.memory_space<semaphore_mem>>
      tpu.wait_dma2 semaphore(%9 : memref<!tpu.dma_semaphore, #tpu.memory_space<semaphore_mem>>) src(%5 : memref<8x128xf32, #tpu.memory_space<any>>) dst(%7 : memref<8x128xf32, #tpu.memory_space<any>>)
      %c0_i32_12 = arith.constant 0 : i32
      %c0_i32_13 = arith.constant 0 : i32
      %c0_i32_14 = arith.constant 0 : i32
      %10 = tpu.memref_slice %arg3[%c0_i32_12, %c0_i32_13, %c0_i32_14] : memref<2x12x128xf32, #tpu.memory_space<any>> -> memref<1x4x128xf32, #tpu.memory_space<any>>
      %11 = tpu.memref_squeeze %10 : memref<1x4x128xf32, #tpu.memory_space<any>> -> memref<4x128xf32, #tpu.memory_space<any>>
      %12 = tpu.memref_slice %arg5[%3] : memref<8x!tpu.dma_semaphore, #tpu.memory_space<semaphore_mem>> -> memref<1x!tpu.dma_semaphore, #tpu.memory_space<semaphore_mem>>
      %13 = tpu.memref_squeeze %12 : memref<1x!tpu.dma_semaphore, #tpu.memory_space<semaphore_mem>> -> memref<!tpu.dma_semaphore, #tpu.memory_space<semaphore_mem>>
      tpu.wait_dma2 semaphore(%13 : memref<!tpu.dma_semaphore, #tpu.memory_space<semaphore_mem>>) src(%arg1 : memref<4x128xf32, #tpu.memory_space<any>>) dst(%11 : memref<4x128xf32, #tpu.memory_space<any>>)
    }
    %c2_i32_4 = arith.constant 2 : i32
    return
  }
}

</mosaic_0001>

<llo_original>
// kernel: tpu_custom_call.1
$region0: #{tpu_custom_call.1}
  #allocation0 [shape = 'u32[]', space=smem, size = 0x4, offset = 0x4, fixed_abs, tag = 'smem constant byte address 0x4 - core index']
  #allocation1 [shape = 'u32[144,128]{1,0:T(1,128)}', space=vmem, size = 0x12000, scoped, tag = 'internal scratch']
  #allocation2 [shape = 's32[8]{0}', space=sflag, size = 0x20, scoped, tag = 'scratch operand']
  #allocation3 [shape = 's32[8]{0}', space=sflag, size = 0x20, scoped, tag = 'scratch operand']
  #allocation4 [shape = 's32[]', space=sflag, size = 0x4, offset = 0, fixed_abs, tag = 'sflag constant byte address 0x0 - dummy sync flag']
  #allocation5 [shape = 's32[]', space=sflag, size = 0x4, offset = 0, fixed_abs, tag = 'sflag constant byte address 0x0 - dummy sync flag']
  #allocation6 [shape = 'u32[]', space=smem, size = 0x4, offset = 0x44, fixed_abs, tag = 'smem constant byte address 0x44 - assertion arg 0']
  #allocation7 [shape = 'u32[]', space=smem, size = 0x4, offset = 0x48, fixed_abs, tag = 'smem constant byte address 0x48 - assertion arg 1']
  #allocation8 [shape = 's32[]', space=sflag, size = 0x4, offset = 0, fixed_abs, tag = 'sflag constant byte address 0x0 - dummy sync flag']
  #allocation9 [shape = 's32[]', space=sflag, size = 0x4, offset = 0, fixed_abs, tag = 'sflag constant byte address 0x0 - dummy sync flag']
  %s0 = inlined_call_operand.hbm [shape: f32[4,128], index: 0, kind: input, shape index: {}]
  %s1 = inlined_call_operand.hbm [shape: f32[2,8,128], index: 1, kind: input, shape index: {}]
  %s2 = inlined_call_operand.vmem [shape: f32[2,12,128], index: 2, kind: output, shape index: {}]
  %s3 = sld [smem:[#allocation0]]
  $region28: #{tpu_custom_call.1} parent=0
    _
  %s5 = ssub.s32 1, %s3
  %s6 = scalar_select 0, %s5, %s3
  loop: start=0, step=1, limit=2
  $region2: #{tpu_custom_call.1} parent=0 // loop_pre_header
    _
  $region3: #{tpu_custom_call.1} parent=0 // loop_header
    %s8 = sphi 0, %s12
    %p9 = scmp.ge.s32.totalorder %s8, 2
  $region4: #{tpu_custom_call.1} parent=0 // loop_header_branch
    %11 = sbr.rel (%p9) target = $region8
  $region5: #{tpu_custom_call.1} parent=0 // loop_body
    %s13 = sand.u32 %s8, 7
    %p14 = scmp.ge.s32.totalorder %s8, 8
    // Predicated region
    $region9: #{tpu_custom_call.1} parent=5 // pred_check
      %p15 = pneg %p14
    $region10: #{tpu_custom_call.1} parent=5 // pred_check_branch
      %17 = sbr.rel (%p15) target = $region12
    $region11: #{tpu_custom_call.1} parent=5 // pred_region
      %s18 = scalar_lea.sflag [#allocation2], %s13
      %s19 = smul.u32 8, 1
      %s20 = sshll.u32 %s19, 4
      %21 = dma.done %s18, %s20
      %s22 = scalar_lea.sflag [#allocation3], %s13
      %s23 = smul.u32 4, 1
      %s24 = sshll.u32 %s23, 4
      %25 = dma.done %s22, %s24
    $region12: #{tpu_custom_call.1} parent=5 // pred_fallthru
      _
    %s26 = smul.u32 %s8, 8
    %s27 = smul.addr %s26, 16
    %s28 = scalar_lea.hbm %s1, %s27
    %s29 = smul.u32 %s8, 16
    %s30 = sadd.s32 4, %s29
    %s31 = scalar_lea.vmem %s2, %s30
    %s32 = scalar_lea.sflag [#allocation2], %s13
    // Predicated region
    $region13: #{tpu_custom_call.1} parent=5 // pred_check
      _
    $region14: #{tpu_custom_call.1} parent=5 // pred_check_branch
      %34 = sbr.rel target = $region16
    $region15: #{tpu_custom_call.1} parent=5 // pred_region
      %35 = sst [smem:[#allocation6]] [#allocation5]
      %36 = sst [smem:[#allocation7]] [#allocation4]
    $region16: #{tpu_custom_call.1} parent=5 // pred_fallthru
      _
    %38 = shalt.err (0)
    %s40 = sshll.u32 %s31, 4
    %s41 = int_to_ptr.vmem [resolvable:$true] %s40
    %43 = dma.hbm_to_vmem [thread:$0]  %s28, 128, %s41, %s32
    %s44 = scalar_lea.vmem %s2, %s29
    %s45 = scalar_lea.sflag [#allocation3], %s13
    // Predicated region
    $region17: #{tpu_custom_call.1} parent=5 // pred_check
      _
    $region18: #{tpu_custom_call.1} parent=5 // pred_check_branch
      %47 = sbr.rel target = $region20
    $region19: #{tpu_custom_call.1} parent=5 // pred_region
      %48 = sst [smem:[#allocation6]] [#allocation9]
      %49 = sst [smem:[#allocation7]] [#allocation8]
    $region20: #{tpu_custom_call.1} parent=5 // pred_fallthru
      _
    %51 = shalt.err (0)
    %s53 = sshll.u32 %s44, 4
    %s54 = int_to_ptr.vmem [resolvable:$true] %s53
    %56 = dma.hbm_to_vmem [thread:$0]  %s0, 64, %s54, %s45
  $region6: #{tpu_custom_call.1} parent=0 // loop_footer
    %s12 = sadd.s32 1, %s8
  $region7: #{tpu_custom_call.1} parent=0 // loop_footer_branch
    %7 = sbr.rel target = $region3
  $region8: #{tpu_custom_call.1} parent=0 // loop_exit
    _
  loop: start=0, step=1, limit=2
  $region21: #{tpu_custom_call.1} parent=0 // loop_pre_header
    _
  $region22: #{tpu_custom_call.1} parent=0 // loop_header
    %s58 = sphi 0, %s62
    %p59 = scmp.ge.s32.totalorder %s58, 2
  $region23: #{tpu_custom_call.1} parent=0 // loop_header_branch
    %61 = sbr.rel (%p59) target = $region27
  $region24: #{tpu_custom_call.1} parent=0 // loop_body
    %s63 = scalar_lea.sflag [#allocation2], %s58
    %s64 = smul.u32 8, 1
    %s65 = sshll.u32 %s64, 4
    %66 = dma.done %s63, %s65
    %s67 = scalar_lea.sflag [#allocation3], %s58
    %s68 = smul.u32 4, 1
    %s69 = sshll.u32 %s68, 4
    %70 = dma.done %s67, %s69
  $region25: #{tpu_custom_call.1} parent=0 // loop_footer
    %s62 = sadd.s32 1, %s58
  $region26: #{tpu_custom_call.1} parent=0 // loop_footer_branch
    %57 = sbr.rel target = $region22
  $region27: #{tpu_custom_call.1} parent=0 // loop_exit
    _
  %71 = vsyncmov [#allocation2]
  %s72 = vpop.sfrf %71
  %p73 = scmp.eq.s32.totalorder %s72, 0
  %p74 = pneg %p73
  %76 = shalt.err (%p74)
  %s77 = scalar_lea.sflag [#allocation2], 1
  %78 = vsyncmov %s77
  %s79 = vpop.sfrf %78
  %p80 = scmp.eq.s32.totalorder %s79, 0
  %p81 = pneg %p80
  %83 = shalt.err (%p81)
  %s84 = scalar_lea.sflag [#allocation2], 2
  %85 = vsyncmov %s84
  %s86 = vpop.sfrf %85
  %p87 = scmp.eq.s32.totalorder %s86, 0
  %p88 = pneg %p87
  %90 = shalt.err (%p88)
  %s91 = scalar_lea.sflag [#allocation2], 3
  %92 = vsyncmov %s91
  %s93 = vpop.sfrf %92
  %p94 = scmp.eq.s32.totalorder %s93, 0
  %p95 = pneg %p94
  %97 = shalt.err (%p95)
  %s98 = scalar_lea.sflag [#allocation2], 4
  %99 = vsyncmov %s98
  %s100 = vpop.sfrf %99
  %p101 = scmp.eq.s32.totalorder %s100, 0
  %p102 = pneg %p101
  %104 = shalt.err (%p102)
  %s105 = scalar_lea.sflag [#allocation2], 5
  %106 = vsyncmov %s105
  %s107 = vpop.sfrf %106
  %p108 = scmp.eq.s32.totalorder %s107, 0
  %p109 = pneg %p108
  %111 = shalt.err (%p109)
  %s112 = scalar_lea.sflag [#allocation2], 6
  %113 = vsyncmov %s112
  %s114 = vpop.sfrf %113
  %p115 = scmp.eq.s32.totalorder %s114, 0
  %p116 = pneg %p115
  %118 = shalt.err (%p116)
  %s119 = scalar_lea.sflag [#allocation2], 7
  %120 = vsyncmov %s119
  %s121 = vpop.sfrf %120
  %p122 = scmp.eq.s32.totalorder %s121, 0
  %p123 = pneg %p122
  %125 = shalt.err (%p123)
  %126 = vsyncmov [#allocation3]
  %s127 = vpop.sfrf %126
  %p128 = scmp.eq.s32.totalorder %s127, 0
  %p129 = pneg %p128
  %131 = shalt.err (%p129)
  %s132 = scalar_lea.sflag [#allocation3], 1
  %133 = vsyncmov %s132
  %s134 = vpop.sfrf %133
  %p135 = scmp.eq.s32.totalorder %s134, 0
  %p136 = pneg %p135
  %138 = shalt.err (%p136)
  %s139 = scalar_lea.sflag [#allocation3], 2
  %140 = vsyncmov %s139
  %s141 = vpop.sfrf %140
  %p142 = scmp.eq.s32.totalorder %s141, 0
  %p143 = pneg %p142
  %145 = shalt.err (%p143)
  %s146 = scalar_lea.sflag [#allocation3], 3
  %147 = vsyncmov %s146
  %s148 = vpop.sfrf %147
  %p149 = scmp.eq.s32.totalorder %s148, 0
  %p150 = pneg %p149
  %152 = shalt.err (%p150)
  %s153 = scalar_lea.sflag [#allocation3], 4
  %154 = vsyncmov %s153
  %s155 = vpop.sfrf %154
  %p156 = scmp.eq.s32.totalorder %s155, 0
  %p157 = pneg %p156
  %159 = shalt.err (%p157)
  %s160 = scalar_lea.sflag [#allocation3], 5
  %161 = vsyncmov %s160
  %s162 = vpop.sfrf %161
  %p163 = scmp.eq.s32.totalorder %s162, 0
  %p164 = pneg %p163
  %166 = shalt.err (%p164)
  %s167 = scalar_lea.sflag [#allocation3], 6
  %168 = vsyncmov %s167
  %s169 = vpop.sfrf %168
  %p170 = scmp.eq.s32.totalorder %s169, 0
  %p171 = pneg %p170
  %173 = shalt.err (%p171)
  %s174 = scalar_lea.sflag [#allocation3], 7
  %175 = vsyncmov %s174
  %s176 = vpop.sfrf %175
  %p177 = scmp.eq.s32.totalorder %s176, 0
  %p178 = pneg %p177
  %180 = shalt.err (%p178)

</llo_original>
